<compile_context>
chip_gen: v6e
topology: v6e:2x2x1
jax: 0.10.0
libtpu: 0.0.40
codegen_flags: <defaults>
</compile_context>

<pallas_src>
import functools
import math

import jax
import jax.numpy as jnp
from jax import lax
from jax.experimental import pallas as pl
from jax.experimental.pallas import tpu as pltpu

_INV_SQRT2 = 1.0 / math.sqrt(2.0)


def _round_up(x, m):
    return (x + m - 1) // m * m


def _layer_norm_f32(x_ref, g_ref, b_ref, *, inv_e, eps, valid_lanes):
    """Two-pass LayerNorm in f32; zero-padded lanes masked out of the variance."""
    x = x_ref[...].astype(jnp.float32)
    mean = jnp.sum(x, axis=-1, keepdims=True) * inv_e        # inv_e uses the real E
    d = x - mean
    if valid_lanes != x.shape[-1]:                            # static Python check
        mask = lax.broadcasted_iota(jnp.int32, (1, x.shape[-1]), 1) < valid_lanes
        d = jnp.where(mask, d, 0.0)
    var = jnp.sum(d * d, axis=-1, keepdims=True) * inv_e
    return (d * lax.rsqrt(var + eps) * g_ref[...].astype(jnp.float32)
            + b_ref[...].astype(jnp.float32))


def _gelu_exact(h):
    # nn.GELU() default = exact (erf) GELU.
    return 0.5 * h * (1.0 + lax.erf(h * _INV_SQRT2))


def _mlp_resident_kernel(x_ref, g_ref, b_ref, w1_ref, b1_ref, w2_ref, b2_ref,
                         o_ref, *, inv_e, eps, valid_lanes):
    # Full W1/W2 are VMEM-resident (constant block index); single fused body.
    xn = _layer_norm_f32(x_ref, g_ref, b_ref, inv_e=inv_e, eps=eps,
                         valid_lanes=valid_lanes)
    xn = xn.astype(w1_ref.dtype)                              # bf16 MXU operand
    h = jnp.dot(xn, w1_ref[...], preferred_element_type=jnp.float32)
    h = _gelu_exact(h + b1_ref[...].astype(jnp.float32))
    # TODO(synk): nn.Dropout(p=0.1) omitted — eval-mode identity semantics.
    out = jnp.dot(h.astype(w2_ref.dtype), w2_ref[...],
                  preferred_element_type=jnp.float32)
    o_ref[...] = (out + b2_ref[...].astype(jnp.float32)).astype(o_ref.dtype)


def _mlp_stream_kernel(x_ref, g_ref, b_ref, w1_ref, b1_ref, w2_ref, b2_ref,
                       o_ref, *scratch, inv_e, eps, valid_lanes, acc_in_out):
    # Hidden dim streamed in TN-wide tiles; LayerNorm cached per token tile.
    if acc_in_out:                     # f32 output: accumulate into o_ref itself
        (xn_ref,) = scratch
        acc_ref = o_ref
    else:                              # bf16 (etc.) output: explicit f32 scratch
        acc_ref, xn_ref = scratch
    k = pl.program_id(1)

    @pl.when(k == 0)
    def _():
        xn = _layer_norm_f32(x_ref, g_ref, b_ref, inv_e=inv_e, eps=eps,
                             valid_lanes=valid_lanes)
        xn_ref[...] = xn.astype(xn_ref.dtype)                 # bf16 MXU operand
        acc_ref[...] = jnp.zeros_like(acc_ref)

    # Hidden tile k: h_k = GELU(xn @ W1[:, k] + b1[k]) ; acc += h_k @ W2[k, :]
    h = jnp.dot(xn_ref[...], w1_ref[...], preferred_element_type=jnp.float32)
    h = _gelu_exact(h + b1_ref[...].astype(jnp.float32))
    # TODO(synk): nn.Dropout(p=0.1) omitted — eval-mode identity semantics.
    acc_ref[...] += jnp.dot(h.astype(w2_ref.dtype), w2_ref[...],
                            preferred_element_type=jnp.float32)

    @pl.when(k == pl.num_programs(1) - 1)
    def _():
        o_ref[...] = (acc_ref[...]
                      + b2_ref[...].astype(jnp.float32)).astype(o_ref.dtype)


def mlp_block(x, ln_w, ln_b, w1, b1, w2, b2, *, eps=1e-5,
              tile_rows=None, tile_hidden=512,
              mxu_dtype=jnp.bfloat16,
              weight_resident_max_bytes=None):
    """x: (B, S, E) -> (B, S, E).  w1: (E, M), w2: (M, E) (= torch weight.T)."""
    B, S, E = x.shape
    M = w1.shape[1]
    N = B * S

    # ---- hardware-aware budgets --------------------------------------------
    try:
        vmem_cap = int(pltpu.get_tpu_info().vmem_capacity_bytes)
    except Exception:                       # be conservative (v7x = 64 MiB)
        vmem_cap = 64 * 1024 * 1024
    budget = vmem_cap - vmem_cap // 8       # 56 MiB on v7x, 112 MiB on v5e/v6e
    if weight_resident_max_bytes is None:
        weight_resident_max_bytes = vmem_cap // 3
    if tile_rows is None:
        # Large token tiles amortize weight (re)streaming; smaller on 64 MiB chips.
        tile_rows = 512 if vmem_cap <= 64 * 1024 * 1024 else 1024

    # ---- padded dims & token tile -------------------------------------------
    e_pad = _round_up(E, 128)
    m128 = _round_up(M, 128)
    n128 = _round_up(N, 128)

    # Keep >= 2 token tiles when possible so both v7x TensorCores get work on
    # the "parallel" token axis (extra grid step is negligible on 1-TC chips).
    if n128 >= 256:
        tm = min(tile_rows, 128 * max(1, (n128 // 128) // 2))
    else:
        tm = n128

    w_isz = jnp.dtype(mxu_dtype).itemsize
    x_isz = jnp.dtype(x.dtype).itemsize
    c_isz = w_isz

    def est_resident(tm_):
        return (2 * tm_ * e_pad * (2 * x_isz)            # x + out (dbl-buffered)
                + 2 * 2 * e_pad * m128 * w_isz           # full W1 + W2 (dbl)
                + 2 * (m128 + 3 * e_pad) * 4             # LN / bias vectors
                + tm_ * e_pad * (4 + c_isz)              # xn f32 + bf16 cast
                + tm_ * m128 * (4 + c_isz))              # h f32 + bf16 cast

    def est_stream(tm_, tn_):
        return (2 * tm_ * e_pad * (2 * x_isz)            # x + out (dbl-buffered)
                + 2 * 2 * e_pad * tn_ * w_isz            # W1/W2 tiles (dbl)
                + 2 * (tn_ + 3 * e_pad) * 4              # LN / bias vectors
                + tm_ * e_pad * (4 + c_isz)              # f32 acc + xn cache
                + tm_ * tn_ * (4 + c_isz))               # h f32 + bf16 cast

    # ---- choose path ---------------------------------------------------------
    w_bytes = 2 * e_pad * m128 * w_isz                    # W1 + W2, one copy
    use_resident = 2 * w_bytes <= min(weight_resident_max_bytes, budget // 2)
    if use_resident:
        tm_r = tm
        while est_resident(tm_r) > budget and tm_r > 128:
            tm_r = max(128, (tm_r // 2) // 128 * 128)
        use_resident = est_resident(tm_r) <= budget
        if use_resident:
            tm = tm_r

    if use_resident:
        m_pad = m128
        tn = m_pad
    else:
        tn = max(128, (min(tile_hidden, m128) // 128) * 128)
        while est_stream(tm, tn) > budget and tn > 128:
            tn = max(128, (tn // 2) // 128 * 128)
        while est_stream(tm, tn) > budget and tm > 128:
            tm = max(128, (tm // 2) // 128 * 128)
        m_pad = _round_up(m128, tn)

    n_pad = _round_up(n128, tm)
    n_tiles = n_pad // tm

    # ---- pad operands (zero padding keeps LN/matmul math exact) -------------
    x2 = jnp.pad(x.reshape(N, E), ((0, n_pad - N), (0, e_pad - E)))
    gp = jnp.pad(ln_w, (0, e_pad - E)).astype(jnp.float32).reshape(1, e_pad)
    bp = jnp.pad(ln_b, (0, e_pad - E)).astype(jnp.float32).reshape(1, e_pad)
    w1p = jnp.pad(w1, ((0, e_pad - E), (0, m_pad - M))).astype(mxu_dtype)
    b1p = jnp.pad(b1, (0, m_pad - M)).astype(jnp.float32).reshape(1, m_pad)
    w2p = jnp.pad(w2, ((0, m_pad - M), (0, e_pad - E))).astype(mxu_dtype)
    b2p = jnp.pad(b2, (0, e_pad - E)).astype(jnp.float32).reshape(1, e_pad)

    flops = 4 * n_pad * e_pad * m_pad

    if use_resident:
        est = est_resident(tm)
        cost = pl.CostEstimate(
            flops=flops, transcendentals=n_pad * m_pad,
            bytes_accessed=int(2 * n_pad * e_pad * x_isz
                               + 2 * e_pad * m_pad * w_isz       # weights once
                               + (m_pad + 3 * e_pad) * 4))
        kernel = functools.partial(_mlp_resident_kernel,
                                   inv_e=1.0 / E, eps=eps, valid_lanes=E)
        out = pl.pallas_call(
            kernel,
            out_shape=jax.ShapeDtypeStruct((n_pad, e_pad), x.dtype),
            grid_spec=pltpu.PrefetchScalarGridSpec(
                num_scalar_prefetch=0,
                grid=(n_tiles,),
                in_specs=[
                    pl.BlockSpec((tm, e_pad), lambda i: (i, 0)),      # x tile
                    pl.BlockSpec((1, e_pad), lambda i: (0, 0)),       # ln weight
                    pl.BlockSpec((1, e_pad), lambda i: (0, 0)),       # ln bias
                    pl.BlockSpec((e_pad, m_pad), lambda i: (0, 0)),   # W1 resident
                    pl.BlockSpec((1, m_pad), lambda i: (0, 0)),       # b1
                    pl.BlockSpec((m_pad, e_pad), lambda i: (0, 0)),   # W2 resident
                    pl.BlockSpec((1, e_pad), lambda i: (0, 0)),       # b2
                ],
                out_specs=pl.BlockSpec((tm, e_pad), lambda i: (i, 0))),
            compiler_params=pltpu.CompilerParams(
                dimension_semantics=("parallel",),
                vmem_limit_bytes=int(min(max(int(1.25 * est), 32 << 20), budget))),
            cost_estimate=cost,
        )(x2, gp, bp, w1p, b1p, w2p, b2p)
    else:
        est = est_stream(tm, tn)
        acc_in_out = jnp.dtype(x.dtype) == jnp.dtype(jnp.float32)
        scratch = [pltpu.VMEM((tm, e_pad), mxu_dtype)]            # cached LayerNorm
        if not acc_in_out:
            scratch.insert(0, pltpu.VMEM((tm, e_pad), jnp.float32))  # f32 acc
        cost = pl.CostEstimate(
            flops=flops, transcendentals=n_pad * m_pad,
            bytes_accessed=int(2 * n_pad * e_pad * x_isz
                               + n_tiles * 2 * e_pad * m_pad * w_isz  # re-streamed
                               + (m_pad + 3 * e_pad) * 4))
        kernel = functools.partial(_mlp_stream_kernel, inv_e=1.0 / E, eps=eps,
                                   valid_lanes=E, acc_in_out=acc_in_out)
        out = pl.pallas_call(
            kernel,
            out_shape=jax.ShapeDtypeStruct((n_pad, e_pad), x.dtype),
            grid_spec=pltpu.PrefetchScalarGridSpec(
                num_scalar_prefetch=0,
                grid=(n_tiles, m_pad // tn),         # hidden (reduction) innermost
                in_specs=[
                    pl.BlockSpec((tm, e_pad), lambda i, k: (i, 0)),   # x tile
                    pl.BlockSpec((1, e_pad), lambda i, k: (0, 0)),    # ln weight
                    pl.BlockSpec((1, e_pad), lambda i, k: (0, 0)),    # ln bias
                    pl.BlockSpec((e_pad, tn), lambda i, k: (0, k)),   # W1 tile
                    pl.BlockSpec((1, tn), lambda i, k: (0, k)),       # b1 tile
                    pl.BlockSpec((tn, e_pad), lambda i, k: (k, 0)),   # W2 tile
                    pl.BlockSpec((1, e_pad), lambda i, k: (0, 0)),    # b2
                ],
                out_specs=pl.BlockSpec((tm, e_pad), lambda i, k: (i, 0)),
                scratch_shapes=scratch),
            compiler_params=pltpu.CompilerParams(
                dimension_semantics=("parallel", "arbitrary"),
                vmem_limit_bytes=int(min(max(int(1.25 * est), 32 << 20), budget))),
            cost_estimate=cost,
        )(x2, gp, bp, w1p, b1p, w2p, b2p)

    return out[:N, :E].reshape(B, S, E)


def _reference(x, ln_w, ln_b, w1, b1, w2, b2, eps=1e-5):
    xf = x.astype(jnp.float32)
    mean = jnp.mean(xf, axis=-1, keepdims=True)
    var = jnp.mean((xf - mean) ** 2, axis=-1, keepdims=True)
    xn = (xf - mean) / jnp.sqrt(var + eps) * ln_w + ln_b
    h = xn @ w1.astype(jnp.float32) + b1
    h = 0.5 * h * (1.0 + lax.erf(h * _INV_SQRT2))
    return h @ w2.astype(jnp.float32) + b2


if __name__ == "__main__":
    base_key = jax.random.PRNGKey(0)

    def make_case(tag, B, S, E, M, x_dtype=jnp.float32):
        key = jax.random.fold_in(base_key, tag)
        kx, k1, k2, k3, k4, k5, k6 = jax.random.split(key, 7)
        x = jax.random.normal(kx, (B, S, E), jnp.float32).astype(x_dtype)
        ln_w = 1.0 + 0.1 * jax.random.normal(k5, (E,), jnp.float32)
        ln_b = 0.1 * jax.random.normal(k6, (E,), jnp.float32)
        w1 = jax.random.normal(k1, (E, M), jnp.float32) * 0.02
        b1 = jax.random.normal(k2, (M,), jnp.float32) * 0.02
        w2 = jax.random.normal(k3, (M, E), jnp.float32) * 0.02
        b2 = jax.random.normal(k4, (E,), jnp.float32) * 0.02
        return x, ln_w, ln_b, w1, b1, w2, b2

    def check(tag, y, args, atol, rtol):
        x = args[0]
        y_ref = _reference(*args)
        assert y.shape == x.shape, f"case {tag}: shape {y.shape} != {x.shape}"
        ok = jnp.allclose(y.astype(jnp.float32), y_ref, atol=atol, rtol=rtol)
        assert ok, f"case {tag}: mismatch vs reference"

    # 1) Small, unaligned dims: lane/token zero-padding, weight-resident path.
    args = make_case(0, 2, 8, 32, 64)
    y = jax.block_until_ready(mlp_block(*args))
    check(1, y, args, atol=1e-2, rtol=1e-2)

    # 2) Moderate dims: weight-resident fast path (full W1/W2 live in VMEM).
    args = make_case(1, 2, 8, 256, 1152)
    y = jax.block_until_ready(mlp_block(*args))
    check(2, y, args, atol=1e-2, rtol=1e-2)

    # 3) Force the hidden-streaming path (multi-tile accumulation into o_ref).
    args = make_case(2, 2, 8, 256, 1152)
    y = jax.block_until_ready(
        mlp_block(*args, weight_resident_max_bytes=0, tile_hidden=512))
    check(3, y, args, atol=1e-2, rtol=1e-2)

    # 4) bf16 activations: streaming path with the explicit f32 accumulator.
    args = make_case(3, 2, 8, 256, 1152, x_dtype=jnp.bfloat16)
    y = jax.block_until_ready(
        mlp_block(*args, weight_resident_max_bytes=0, tile_hidden=512))
    check(4, y, args, atol=3e-2, rtol=3e-2)

    print("KERNEL_OK")
</pallas_src>

<mosaic_0001>
module attributes {stable_mosaic.version = 11 : i64} {
  func.func @_mlp_resident_kernel(%arg0: i32, %arg1: memref<128x128xf32, #tpu.memory_space<vmem>>, %arg2: memref<1x128xf32, #tpu.memory_space<vmem>>, %arg3: memref<1x128xf32, #tpu.memory_space<vmem>>, %arg4: memref<128x128xbf16, #tpu.memory_space<vmem>>, %arg5: memref<1x128xf32, #tpu.memory_space<vmem>>, %arg6: memref<128x128xbf16, #tpu.memory_space<vmem>>, %arg7: memref<1x128xf32, #tpu.memory_space<vmem>>, %arg8: memref<128x128xf32, #tpu.memory_space<vmem>>) attributes {dimension_semantics = [#tpu.dimension_semantics<parallel>], iteration_bounds = array<i64: 1>, scalar_prefetch = 0 : i64, scratch_operands = 0 : i64, tpu.core_type = #tpu.core_type<tc>, window_params = [{transform_indices = @transform_0, window_bounds = array<i64: 128, 128>}, {pipeline_mode = #tpu.pipeline_mode<synchronous>, transform_indices = @transform_1, window_bounds = array<i64: 1, 128>}, {pipeline_mode = #tpu.pipeline_mode<synchronous>, transform_indices = @transform_2, window_bounds = array<i64: 1, 128>}, {pipeline_mode = #tpu.pipeline_mode<synchronous>, transform_indices = @transform_3, window_bounds = array<i64: 128, 128>}, {pipeline_mode = #tpu.pipeline_mode<synchronous>, transform_indices = @transform_4, window_bounds = array<i64: 1, 128>}, {pipeline_mode = #tpu.pipeline_mode<synchronous>, transform_indices = @transform_5, window_bounds = array<i64: 128, 128>}, {pipeline_mode = #tpu.pipeline_mode<synchronous>, transform_indices = @transform_6, window_bounds = array<i64: 1, 128>}, {transform_indices = @transform_7, window_bounds = array<i64: 128, 128>}]} {
    %c0 = arith.constant 0 : index
    %c0_0 = arith.constant 0 : index
    %0 = vector.load %arg1[%c0, %c0_0] : memref<128x128xf32, #tpu.memory_space<vmem>>, vector<128x128xf32>
    %cst = arith.constant dense<0.000000e+00> : vector<128xf32>
    %1 = vector.multi_reduction <add>, %0, %cst [1] : vector<128x128xf32> to vector<128xf32>
    %2 = vector.shape_cast %1 : vector<128xf32> to vector<128x1xf32>
    %cst_1 = arith.constant 3.125000e-02 : f32
    %3 = vector.broadcast %cst_1 : f32 to vector<128x1xf32>
    %4 = arith.mulf %2, %3 : vector<128x1xf32>
    %5 = vector.broadcast %4 : vector<128x1xf32> to vector<128x128xf32>
    %6 = arith.subf %0, %5 : vector<128x128xf32>
    %7 = tpu.iota {dimensions = array<i32: 1>} : vector<1x128xi32>
    %c32_i32 = arith.constant 32 : i32
    %8 = vector.broadcast %c32_i32 : i32 to vector<1x128xi32>
    %9 = arith.cmpi slt, %7, %8 : vector<1x128xi32>
    %cst_2 = arith.constant 0.000000e+00 : f32
    %10 = vector.shape_cast %9 : vector<1x128xi1> to vector<1x128xi1>
    %11 = vector.broadcast %10 : vector<1x128xi1> to vector<128x128xi1>
    %12 = vector.broadcast %cst_2 : f32 to vector<128x128xf32>
    %13 = arith.select %11, %6, %12 : vector<128x128xi1>, vector<128x128xf32>
    %14 = arith.mulf %13, %13 : vector<128x128xf32>
    %cst_3 = arith.constant dense<0.000000e+00> : vector<128xf32>
    %15 = vector.multi_reduction <add>, %14, %cst_3 [1] : vector<128x128xf32> to vector<128xf32>
    %16 = vector.shape_cast %15 : vector<128xf32> to vector<128x1xf32>
    %cst_4 = arith.constant 3.125000e-02 : f32
    %17 = vector.broadcast %cst_4 : f32 to vector<128x1xf32>
    %18 = arith.mulf %16, %17 : vector<128x1xf32>
    %cst_5 = arith.constant 9.99999974E-6 : f32
    %19 = vector.broadcast %cst_5 : f32 to vector<128x1xf32>
    %20 = arith.addf %18, %19 : vector<128x1xf32>
    %21 = math.rsqrt %20 : vector<128x1xf32>
    %22 = vector.broadcast %21 : vector<128x1xf32> to vector<128x128xf32>
    %23 = arith.mulf %13, %22 : vector<128x128xf32>
    %c0_6 = arith.constant 0 : index
    %c0_7 = arith.constant 0 : index
    %24 = vector.load %arg2[%c0_6, %c0_7] : memref<1x128xf32, #tpu.memory_space<vmem>>, vector<1x128xf32>
    %25 = vector.broadcast %24 : vector<1x128xf32> to vector<128x128xf32>
    %26 = arith.mulf %23, %25 : vector<128x128xf32>
    %c0_8 = arith.constant 0 : index
    %c0_9 = arith.constant 0 : index
    %27 = vector.load %arg3[%c0_8, %c0_9] : memref<1x128xf32, #tpu.memory_space<vmem>>, vector<1x128xf32>
    %28 = vector.broadcast %27 : vector<1x128xf32> to vector<128x128xf32>
    %29 = arith.addf %26, %28 : vector<128x128xf32>
    %30 = arith.truncf %29 : vector<128x128xf32> to vector<128x128xbf16>
    %c0_10 = arith.constant 0 : index
    %c0_11 = arith.constant 0 : index
    %31 = vector.load %arg4[%c0_10, %c0_11] : memref<128x128xbf16, #tpu.memory_space<vmem>>, vector<128x128xbf16>
    %cst_12 = arith.constant dense<0.000000e+00> : vector<128x128xf32>
    %32 = tpu.matmul %30, %31, %cst_12 {dimension_numbers = #tpu.dot_dimension_numbers<[1], [0], [0], [1], [0, 0, 1, 1], [], []>} : vector<128x128xbf16>, vector<128x128xbf16>, vector<128x128xf32> -> vector<128x128xf32>
    %c0_13 = arith.constant 0 : index
    %c0_14 = arith.constant 0 : index
    %33 = vector.load %arg5[%c0_13, %c0_14] : memref<1x128xf32, #tpu.memory_space<vmem>>, vector<1x128xf32>
    %34 = vector.broadcast %33 : vector<1x128xf32> to vector<128x128xf32>
    %35 = arith.addf %32, %34 : vector<128x128xf32>
    %cst_15 = arith.constant 5.000000e-01 : f32
    %36 = vector.broadcast %cst_15 : f32 to vector<128x128xf32>
    %37 = arith.mulf %36, %35 : vector<128x128xf32>
    %cst_16 = arith.constant 0.707106769 : f32
    %38 = vector.broadcast %cst_16 : f32 to vector<128x128xf32>
    %39 = arith.mulf %35, %38 : vector<128x128xf32>
    %40 = math.erf %39 : vector<128x128xf32>
    %cst_17 = arith.constant 1.000000e+00 : f32
    %41 = vector.broadcast %cst_17 : f32 to vector<128x128xf32>
    %42 = arith.addf %41, %40 : vector<128x128xf32>
    %43 = arith.mulf %37, %42 : vector<128x128xf32>
    %44 = arith.truncf %43 : vector<128x128xf32> to vector<128x128xbf16>
    %c0_18 = arith.constant 0 : index
    %c0_19 = arith.constant 0 : index
    %45 = vector.load %arg6[%c0_18, %c0_19] : memref<128x128xbf16, #tpu.memory_space<vmem>>, vector<128x128xbf16>
    %cst_20 = arith.constant dense<0.000000e+00> : vector<128x128xf32>
    %46 = tpu.matmul %44, %45, %cst_20 {dimension_numbers = #tpu.dot_dimension_numbers<[1], [0], [0], [1], [0, 0, 1, 1], [], []>} : vector<128x128xbf16>, vector<128x128xbf16>, vector<128x128xf32> -> vector<128x128xf32>
    %c0_21 = arith.constant 0 : index
    %c0_22 = arith.constant 0 : index
    %47 = vector.load %arg7[%c0_21, %c0_22] : memref<1x128xf32, #tpu.memory_space<vmem>>, vector<1x128xf32>
    %48 = vector.broadcast %47 : vector<1x128xf32> to vector<128x128xf32>
    %49 = arith.addf %46, %48 : vector<128x128xf32>
    %c0_23 = arith.constant 0 : index
    %c0_24 = arith.constant 0 : index
    %50 = vector.load %arg8[%c0_23, %c0_24] : memref<128x128xf32, #tpu.memory_space<vmem>>, vector<128x128xf32>
    tpu.vector_store %arg8[%c0_23, %c0_24], %49 {strides = array<i32>} : memref<128x128xf32, #tpu.memory_space<vmem>>, vector<128x128xf32>,
    return
  }
  func.func @transform_0(%arg0: i32) -> (i32, i32) {
    %c0_i32 = arith.constant 0 : i32
    %c0_i32_0 = arith.constant 0 : i32
    return %arg0, %c0_i32 : i32, i32
  }
  func.func @transform_1(%arg0: i32) -> (i32, i32) {
    %c0_i32 = arith.constant 0 : i32
    %c0_i32_0 = arith.constant 0 : i32
    %c0_i32_1 = arith.constant 0 : i32
    return %c0_i32, %c0_i32_0 : i32, i32
  }
  func.func @transform_2(%arg0: i32) -> (i32, i32) {
    %c0_i32 = arith.constant 0 : i32
    %c0_i32_0 = arith.constant 0 : i32
    %c0_i32_1 = arith.constant 0 : i32
    return %c0_i32, %c0_i32_0 : i32, i32
  }
  func.func @transform_3(%arg0: i32) -> (i32, i32) {
    %c0_i32 = arith.constant 0 : i32
    %c0_i32_0 = arith.constant 0 : i32
    %c0_i32_1 = arith.constant 0 : i32
    return %c0_i32, %c0_i32_0 : i32, i32
  }
  func.func @transform_4(%arg0: i32) -> (i32, i32) {
    %c0_i32 = arith.constant 0 : i32
    %c0_i32_0 = arith.constant 0 : i32
    %c0_i32_1 = arith.constant 0 : i32
    return %c0_i32, %c0_i32_0 : i32, i32
  }
  func.func @transform_5(%arg0: i32) -> (i32, i32) {
    %c0_i32 = arith.constant 0 : i32
    %c0_i32_0 = arith.constant 0 : i32
    %c0_i32_1 = arith.constant 0 : i32
    return %c0_i32, %c0_i32_0 : i32, i32
  }
  func.func @transform_6(%arg0: i32) -> (i32, i32) {
    %c0_i32 = arith.constant 0 : i32
    %c0_i32_0 = arith.constant 0 : i32
    %c0_i32_1 = arith.constant 0 : i32
    return %c0_i32, %c0_i32_0 : i32, i32
  }
  func.func @transform_7(%arg0: i32) -> (i32, i32) {
    %c0_i32 = arith.constant 0 : i32
    %c0_i32_0 = arith.constant 0 : i32
    return %arg0, %c0_i32 : i32, i32
  }
}

</mosaic_0001>

<llo_original>
// kernel: tpu_custom_call.1
$region0: #{tpu_custom_call.1}
  #allocation0 [shape = 'u32[]', space=smem, size = 0x4, offset = 0x4, fixed_abs, tag = 'smem constant byte address 0x4 - core index']
  #allocation1 [shape = 'u32[144,128]{1,0:T(1,128)}', space=vmem, size = 0x12000, scoped, tag = 'internal scratch']
  %s0 = inlined_call_operand.hbm [shape: f32[128,128], index: 0, kind: input, shape index: {}]
  %s1 = inlined_call_operand.vmem [shape: f32[1,128], index: 1, kind: input, shape index: {}]
  %s2 = inlined_call_operand.vmem [shape: f32[1,128], index: 2, kind: input, shape index: {}]
  %s3 = inlined_call_operand.hbm [shape: bf16[128,128], index: 3, kind: input, shape index: {}]
  %s4 = inlined_call_operand.vmem [shape: f32[1,128], index: 4, kind: input, shape index: {}]
  %s5 = inlined_call_operand.hbm [shape: bf16[128,128], index: 5, kind: input, shape index: {}]
  %s6 = inlined_call_operand.vmem [shape: f32[1,128], index: 6, kind: input, shape index: {}]
  %s7 = inlined_call_operand.hbm [shape: f32[128,128], index: 7, kind: output, shape index: {}]
  %s8 = sld [smem:[#allocation0]]
  $region50: #{tpu_custom_call.1} parent=0
    _
  %s10 = ssub.s32 1, %s8
  %s11 = scalar_select 0, %s10, %s8
  $region1: #{tpu_custom_call.1} parent=0
    #allocation2 [shape = 'u8[65536]{0}', space=vmem, size = 0x10000, scoped, tag = 'input window, operand 0, single buffered']
    #allocation3 [shape = 's32[1]{0}', space=sflag, size = 0x4, scoped, tag = 'scoped memory for tpu_custom_call.1']
    #allocation4 [shape = 's32[1]{0}', space=sflag, size = 0x4, scoped, tag = 'scoped memory for tpu_custom_call.1']
    #allocation5 [shape = 'u8[32768]{0}', space=vmem, size = 0x8000, scoped, tag = 'input window, operand 3, single buffered']
    #allocation6 [shape = 's32[1]{0}', space=sflag, size = 0x4, scoped, tag = 'scoped memory for tpu_custom_call.1']
    #allocation7 [shape = 'u8[32768]{0}', space=vmem, size = 0x8000, scoped, tag = 'input window, operand 5, single buffered']
    #allocation8 [shape = 'u8[65536]{0}', space=vmem, size = 0x10000, scoped, tag = 'output window, operand 0, single buffered']
    %12 = vsyncpa [#allocation3], 0
    %13 = vsyncpa [#allocation6], 0
    %14 = vsyncpa [#allocation4], 0
    // Predicated region
    $region2: #{tpu_custom_call.1} parent=1 // pred_check
      _
    $region3: #{tpu_custom_call.1} parent=1 // pred_check_branch
      %16 = sbr.rel (0) target = $region5
    $region4: #{tpu_custom_call.1} parent=1 // pred_region
      %s18 = ssub.s32 2048, 2048
      %19 = vsyncadd [#allocation3], %s18
      %s20 = sshll.u32 [#allocation2], 4
      %s21 = int_to_ptr.vmem [resolvable:$true] %s20
      %26 = dma.hbm_to_vmem [thread:$0]  %s0, 2048, %s21, [#allocation3], 128, 128, 8
    $region5: #{tpu_custom_call.1} parent=1 // pred_fallthru
      _
    // Predicated region
    $region6: #{tpu_custom_call.1} parent=1 // pred_check
      _
    $region7: #{tpu_custom_call.1} parent=1 // pred_check_branch
      %28 = sbr.rel (0) target = $region9
    $region8: #{tpu_custom_call.1} parent=1 // pred_region
      _
    $region9: #{tpu_custom_call.1} parent=1 // pred_fallthru
      _
    // Predicated region
    $region10: #{tpu_custom_call.1} parent=1 // pred_check
      _
    $region11: #{tpu_custom_call.1} parent=1 // pred_check_branch
      %30 = sbr.rel (0) target = $region13
    $region12: #{tpu_custom_call.1} parent=1 // pred_region
      _
    $region13: #{tpu_custom_call.1} parent=1 // pred_fallthru
      _
    // Predicated region
    $region14: #{tpu_custom_call.1} parent=1 // pred_check
      _
    $region15: #{tpu_custom_call.1} parent=1 // pred_check_branch
      %32 = sbr.rel (0) target = $region17
    $region16: #{tpu_custom_call.1} parent=1 // pred_region
      %s34 = ssub.s32 1024, 1024
      %35 = vsyncadd [#allocation6], %s34
      %s36 = sshll.u32 [#allocation5], 4
      %s37 = int_to_ptr.vmem [resolvable:$true] %s36
      %42 = dma.hbm_to_vmem [thread:$0]  %s3, 1024, %s37, [#allocation6], 64, 64, 4
    $region17: #{tpu_custom_call.1} parent=1 // pred_fallthru
      _
    // Predicated region
    $region18: #{tpu_custom_call.1} parent=1 // pred_check
      _
    $region19: #{tpu_custom_call.1} parent=1 // pred_check_branch
      %44 = sbr.rel (0) target = $region21
    $region20: #{tpu_custom_call.1} parent=1 // pred_region
      _
    $region21: #{tpu_custom_call.1} parent=1 // pred_fallthru
      _
    // Predicated region
    $region22: #{tpu_custom_call.1} parent=1 // pred_check
      _
    $region23: #{tpu_custom_call.1} parent=1 // pred_check_branch
      %46 = sbr.rel (0) target = $region25
    $region24: #{tpu_custom_call.1} parent=1 // pred_region
      %s48 = ssub.s32 1024, 1024
      %49 = vsyncadd [#allocation6], %s48
      %s50 = sshll.u32 [#allocation7], 4
      %s51 = int_to_ptr.vmem [resolvable:$true] %s50
      %56 = dma.hbm_to_vmem [thread:$0]  %s5, 1024, %s51, [#allocation6], 64, 64, 4
    $region25: #{tpu_custom_call.1} parent=1 // pred_fallthru
      _
    // Predicated region
    $region26: #{tpu_custom_call.1} parent=1 // pred_check
      _
    $region27: #{tpu_custom_call.1} parent=1 // pred_check_branch
      %58 = sbr.rel (0) target = $region29
    $region28: #{tpu_custom_call.1} parent=1 // pred_region
      _
    $region29: #{tpu_custom_call.1} parent=1 // pred_fallthru
      _
    // Predicated region
    $region30: #{tpu_custom_call.1} parent=1 // pred_check
      _
    $region31: #{tpu_custom_call.1} parent=1 // pred_check_branch
      %60 = sbr.rel (0) target = $region33
    $region32: #{tpu_custom_call.1} parent=1 // pred_region
      %61 = dma.done [#allocation3], 2048
    $region33: #{tpu_custom_call.1} parent=1 // pred_fallthru
      _
    // Predicated region
    $region34: #{tpu_custom_call.1} parent=1 // pred_check
      _
    $region35: #{tpu_custom_call.1} parent=1 // pred_check_branch
      %63 = sbr.rel (0) target = $region37
    $region36: #{tpu_custom_call.1} parent=1 // pred_region
      %64 = dma.done [#allocation6], 1024
    $region37: #{tpu_custom_call.1} parent=1 // pred_fallthru
      _
    // Predicated region
    $region38: #{tpu_custom_call.1} parent=1 // pred_check
      _
    $region39: #{tpu_custom_call.1} parent=1 // pred_check_branch
      %66 = sbr.rel (0) target = $region41
    $region40: #{tpu_custom_call.1} parent=1 // pred_region
      %67 = dma.done [#allocation6], 1024
    $region41: #{tpu_custom_call.1} parent=1 // pred_fallthru
      _
    %v69 = vld [vmem:[#allocation2] sm:$0xff]
    %v70 = vld [vmem:[#allocation2 + $0x8] sm:$0xff]
    %v71 = vld [vmem:[#allocation2 + $0x10] sm:$0xff]
    %v72 = vld [vmem:[#allocation2 + $0x18] sm:$0xff]
    %v73 = vld [vmem:[#allocation2 + $0x20] sm:$0xff]
    %v74 = vld [vmem:[#allocation2 + $0x28] sm:$0xff]
    %v75 = vld [vmem:[#allocation2 + $0x30] sm:$0xff]
    %v76 = vld [vmem:[#allocation2 + $0x38] sm:$0xff]
    %v77 = vld [vmem:[#allocation2 + $0x40] sm:$0xff]
    %v78 = vld [vmem:[#allocation2 + $0x48] sm:$0xff]
    %v79 = vld [vmem:[#allocation2 + $0x50] sm:$0xff]
    %v80 = vld [vmem:[#allocation2 + $0x58] sm:$0xff]
    %v81 = vld [vmem:[#allocation2 + $0x60] sm:$0xff]
    %v82 = vld [vmem:[#allocation2 + $0x68] sm:$0xff]
    %v83 = vld [vmem:[#allocation2 + $0x70] sm:$0xff]
    %v84 = vld [vmem:[#allocation2 + $0x78] sm:$0xff]
    %85 = vadd.xlane.f32.xlu0 %v69
    %v86 = vpop.xlane.xlu0 %85
    %87 = vadd.xlane.f32.xlu0 %v70
    %v88 = vpop.xlane.xlu0 %87
    %89 = vadd.xlane.f32.xlu0 %v71
    %v90 = vpop.xlane.xlu0 %89
    %91 = vadd.xlane.f32.xlu0 %v72
    %v92 = vpop.xlane.xlu0 %91
    %93 = vadd.xlane.f32.xlu0 %v73
    %v94 = vpop.xlane.xlu0 %93
    %95 = vadd.xlane.f32.xlu0 %v74
    %v96 = vpop.xlane.xlu0 %95
    %97 = vadd.xlane.f32.xlu0 %v75
    %v98 = vpop.xlane.xlu0 %97
    %99 = vadd.xlane.f32.xlu0 %v76
    %v100 = vpop.xlane.xlu0 %99
    %101 = vadd.xlane.f32.xlu0 %v77
    %v102 = vpop.xlane.xlu0 %101
    %103 = vadd.xlane.f32.xlu0 %v78
    %v104 = vpop.xlane.xlu0 %103
    %105 = vadd.xlane.f32.xlu0 %v79
    %v106 = vpop.xlane.xlu0 %105
    %107 = vadd.xlane.f32.xlu0 %v80
    %v108 = vpop.xlane.xlu0 %107
    %109 = vadd.xlane.f32.xlu0 %v81
    %v110 = vpop.xlane.xlu0 %109
    %111 = vadd.xlane.f32.xlu0 %v82
    %v112 = vpop.xlane.xlu0 %111
    %113 = vadd.xlane.f32.xlu0 %v83
    %v114 = vpop.xlane.xlu0 %113
    %115 = vadd.xlane.f32.xlu0 %v84
    %v116 = vpop.xlane.xlu0 %115
    %v117 = vmul.f32 %v86, 0.03125
    %v118 = vmul.f32 %v88, 0.03125
    %v119 = vmul.f32 %v90, 0.03125
    %v120 = vmul.f32 %v92, 0.03125
    %v121 = vmul.f32 %v94, 0.03125
    %v122 = vmul.f32 %v96, 0.03125
    %v123 = vmul.f32 %v98, 0.03125
    %v124 = vmul.f32 %v100, 0.03125
    %v125 = vmul.f32 %v102, 0.03125
    %v126 = vmul.f32 %v104, 0.03125
    %v127 = vmul.f32 %v106, 0.03125
    %v128 = vmul.f32 %v108, 0.03125
    %v129 = vmul.f32 %v110, 0.03125
    %v130 = vmul.f32 %v112, 0.03125
    %v131 = vmul.f32 %v114, 0.03125
    %v132 = vmul.f32 %v116, 0.03125
    %v133 = vsub.f32 %v69, %v117
    %v134 = vsub.f32 %v70, %v118
    %v135 = vsub.f32 %v71, %v119
    %v136 = vsub.f32 %v72, %v120
    %v137 = vsub.f32 %v73, %v121
    %v138 = vsub.f32 %v74, %v122
    %v139 = vsub.f32 %v75, %v123
    %v140 = vsub.f32 %v76, %v124
    %v141 = vsub.f32 %v77, %v125
    %v142 = vsub.f32 %v78, %v126
    %v143 = vsub.f32 %v79, %v127
    %v144 = vsub.f32 %v80, %v128
    %v145 = vsub.f32 %v81, %v129
    %v146 = vsub.f32 %v82, %v130
    %v147 = vsub.f32 %v83, %v131
    %v148 = vsub.f32 %v84, %v132
    %v149 = vlaneseq
    %v150 = vand.u32 %v149, 127
    %vm151 = vcmp.lt.s32.totalorder %v150, 32
    %v152 = vsel %vm151, 1, 0
    %vm153 = vcmp.eq.s32.totalorder %v152, 1
    %v154 = vsel %vm153, %v133, 0.0
    %v155 = vsel %vm153, %v134, 0.0
    %v156 = vsel %vm153, %v135, 0.0
    %v157 = vsel %vm153, %v136, 0.0
    %v158 = vsel %vm153, %v137, 0.0
    %v159 = vsel %vm153, %v138, 0.0
    %v160 = vsel %vm153, %v139, 0.0
    %v161 = vsel %vm153, %v140, 0.0
    %v162 = vsel %vm153, %v141, 0.0
    %v163 = vsel %vm153, %v142, 0.0
    %v164 = vsel %vm153, %v143, 0.0
    %v165 = vsel %vm153, %v144, 0.0
    %v166 = vsel %vm153, %v145, 0.0
    %v167 = vsel %vm153, %v146, 0.0
    %v168 = vsel %vm153, %v147, 0.0
    %v169 = vsel %vm153, %v148, 0.0
    %v170 = vmul.f32 %v154, %v154
    %v171 = vmul.f32 %v155, %v155
    %v172 = vmul.f32 %v156, %v156
    %v173 = vmul.f32 %v157, %v157
    %v174 = vmul.f32 %v158, %v158
    %v175 = vmul.f32 %v159, %v159
    %v176 = vmul.f32 %v160, %v160
    %v177 = vmul.f32 %v161, %v161
    %v178 = vmul.f32 %v162, %v162
    %v179 = vmul.f32 %v163, %v163
    %v180 = vmul.f32 %v164, %v164
    %v181 = vmul.f32 %v165, %v165
    %v182 = vmul.f32 %v166, %v166
    %v183 = vmul.f32 %v167, %v167
    %v184 = vmul.f32 %v168, %v168
    %v185 = vmul.f32 %v169, %v169
    %186 = vadd.xlane.f32.xlu0 %v170
    %v187 = vpop.xlane.xlu0 %186
    %188 = vadd.xlane.f32.xlu0 %v171
    %v189 = vpop.xlane.xlu0 %188
    %190 = vadd.xlane.f32.xlu0 %v172
    %v191 = vpop.xlane.xlu0 %190
    %192 = vadd.xlane.f32.xlu0 %v173
    %v193 = vpop.xlane.xlu0 %192
    %194 = vadd.xlane.f32.xlu0 %v174
    %v195 = vpop.xlane.xlu0 %194
    %196 = vadd.xlane.f32.xlu0 %v175
    %v197 = vpop.xlane.xlu0 %196
    %198 = vadd.xlane.f32.xlu0 %v176
    %v199 = vpop.xlane.xlu0 %198
    %200 = vadd.xlane.f32.xlu0 %v177
    %v201 = vpop.xlane.xlu0 %200
    %202 = vadd.xlane.f32.xlu0 %v178
    %v203 = vpop.xlane.xlu0 %202
    %204 = vadd.xlane.f32.xlu0 %v179
    %v205 = vpop.xlane.xlu0 %204
    %206 = vadd.xlane.f32.xlu0 %v180
    %v207 = vpop.xlane.xlu0 %206
    %208 = vadd.xlane.f32.xlu0 %v181
    %v209 = vpop.xlane.xlu0 %208
    %210 = vadd.xlane.f32.xlu0 %v182
    %v211 = vpop.xlane.xlu0 %210
    %212 = vadd.xlane.f32.xlu0 %v183
    %v213 = vpop.xlane.xlu0 %212
    %214 = vadd.xlane.f32.xlu0 %v184
    %v215 = vpop.xlane.xlu0 %214
    %216 = vadd.xlane.f32.xlu0 %v185
    %v217 = vpop.xlane.xlu0 %216
    %v218 = vmul.f32 %v187, 0.03125
    %v219 = vmul.f32 %v189, 0.03125
    %v220 = vmul.f32 %v191, 0.03125
    %v221 = vmul.f32 %v193, 0.03125
    %v222 = vmul.f32 %v195, 0.03125
    %v223 = vmul.f32 %v197, 0.03125
    %v224 = vmul.f32 %v199, 0.03125
    %v225 = vmul.f32 %v201, 0.03125
    %v226 = vmul.f32 %v203, 0.03125
    %v227 = vmul.f32 %v205, 0.03125
    %v228 = vmul.f32 %v207, 0.03125
    %v229 = vmul.f32 %v209, 0.03125
    %v230 = vmul.f32 %v211, 0.03125
    %v231 = vmul.f32 %v213, 0.03125
    %v232 = vmul.f32 %v215, 0.03125
    %v233 = vmul.f32 %v217, 0.03125
    %v234 = vadd.f32 %v218, 1e-05
    %v235 = vadd.f32 %v219, 1e-05
    %v236 = vadd.f32 %v220, 1e-05
    %v237 = vadd.f32 %v221, 1e-05
    %v238 = vadd.f32 %v222, 1e-05
    %v239 = vadd.f32 %v223, 1e-05
    %v240 = vadd.f32 %v224, 1e-05
    %v241 = vadd.f32 %v225, 1e-05
    %v242 = vadd.f32 %v226, 1e-05
    %v243 = vadd.f32 %v227, 1e-05
    %v244 = vadd.f32 %v228, 1e-05
    %v245 = vadd.f32 %v229, 1e-05
    %v246 = vadd.f32 %v230, 1e-05
    %v247 = vadd.f32 %v231, 1e-05
    %v248 = vadd.f32 %v232, 1e-05
    %v249 = vadd.f32 %v233, 1e-05
    %v250 = vrsqrt.pop %v234
    %v251 = vrsqrt.pop %v235
    %v252 = vrsqrt.pop %v236
    %v253 = vrsqrt.pop %v237
    %v254 = vrsqrt.pop %v238
    %v255 = vrsqrt.pop %v239
    %v256 = vrsqrt.pop %v240
    %v257 = vrsqrt.pop %v241
    %v258 = vrsqrt.pop %v242
    %v259 = vrsqrt.pop %v243
    %v260 = vrsqrt.pop %v244
    %v261 = vrsqrt.pop %v245
    %v262 = vrsqrt.pop %v246
    %v263 = vrsqrt.pop %v247
    %v264 = vrsqrt.pop %v248
    %v265 = vrsqrt.pop %v249
    %v266 = vmul.f32 %v154, %v250
    %v267 = vmul.f32 %v155, %v251
    %v268 = vmul.f32 %v156, %v252
    %v269 = vmul.f32 %v157, %v253
    %v270 = vmul.f32 %v158, %v254
    %v271 = vmul.f32 %v159, %v255
    %v272 = vmul.f32 %v160, %v256
    %v273 = vmul.f32 %v161, %v257
    %v274 = vmul.f32 %v162, %v258
    %v275 = vmul.f32 %v163, %v259
    %v276 = vmul.f32 %v164, %v260
    %v277 = vmul.f32 %v165, %v261
    %v278 = vmul.f32 %v166, %v262
    %v279 = vmul.f32 %v167, %v263
    %v280 = vmul.f32 %v168, %v264
    %v281 = vmul.f32 %v169, %v265
    %v282 = vld [vmem:[%s1] sm:$0x1]
    %v284 = vlaneseq
    %v285 = vshrl.u32 %v284, 7
    %v286 = vsub.s32 0, %v285
    %v287 = vrot.slane %v282, %v286
    %v289 = vmul.f32 %v266, %v287
    %v290 = vmul.f32 %v267, %v287
    %v291 = vmul.f32 %v268, %v287
    %v292 = vmul.f32 %v269, %v287
    %v293 = vmul.f32 %v270, %v287
    %v294 = vmul.f32 %v271, %v287
    %v295 = vmul.f32 %v272, %v287
    %v296 = vmul.f32 %v273, %v287
    %v297 = vmul.f32 %v274, %v287
    %v298 = vmul.f32 %v275, %v287
    %v299 = vmul.f32 %v276, %v287
    %v300 = vmul.f32 %v277, %v287
    %v301 = vmul.f32 %v278, %v287
    %v302 = vmul.f32 %v279, %v287
    %v303 = vmul.f32 %v280, %v287
    %v304 = vmul.f32 %v281, %v287
    %v305 = vld [vmem:[%s2] sm:$0x1]
    %v307 = vlaneseq
    %v308 = vshrl.u32 %v307, 7
    %v309 = vsub.s32 0, %v308
    %v310 = vrot.slane %v305, %v309
    %v312 = vadd.f32 %v289, %v310
    %v313 = vadd.f32 %v290, %v310
    %v314 = vadd.f32 %v291, %v310
    %v315 = vadd.f32 %v292, %v310
    %v316 = vadd.f32 %v293, %v310
    %v317 = vadd.f32 %v294, %v310
    %v318 = vadd.f32 %v295, %v310
    %v319 = vadd.f32 %v296, %v310
    %v320 = vadd.f32 %v297, %v310
    %v321 = vadd.f32 %v298, %v310
    %v322 = vadd.f32 %v299, %v310
    %v323 = vadd.f32 %v300, %v310
    %v324 = vadd.f32 %v301, %v310
    %v325 = vadd.f32 %v302, %v310
    %v326 = vadd.f32 %v303, %v310
    %v327 = vadd.f32 %v304, %v310
    %v328 = vpack.c.bf16 %v313, %v312
    %v329 = vpack.c.bf16 %v315, %v314
    %v330 = vpack.c.bf16 %v317, %v316
    %v331 = vpack.c.bf16 %v319, %v318
    %v332 = vpack.c.bf16 %v321, %v320
    %v333 = vpack.c.bf16 %v323, %v322
    %v334 = vpack.c.bf16 %v325, %v324
    %v335 = vpack.c.bf16 %v327, %v326
    %v336 = vld [vmem:[#allocation5] sm:$0xf]
    %v337 = vld [vmem:[#allocation5 + $0x4] sm:$0xf]
    %v338 = vld [vmem:[#allocation5 + $0x8] sm:$0xf]
    %v339 = vld [vmem:[#allocation5 + $0xc] sm:$0xf]
    %v340 = vld [vmem:[#allocation5 + $0x10] sm:$0xf]
    %v341 = vld [vmem:[#allocation5 + $0x14] sm:$0xf]
    %v342 = vld [vmem:[#allocation5 + $0x18] sm:$0xf]
    %v343 = vld [vmem:[#allocation5 + $0x1c] sm:$0xf]
    %v344 = vld [vmem:[#allocation5 + $0x20] sm:$0xf]
    %v345 = vld [vmem:[#allocation5 + $0x24] sm:$0xf]
    %v346 = vld [vmem:[#allocation5 + $0x28] sm:$0xf]
    %v347 = vld [vmem:[#allocation5 + $0x2c] sm:$0xf]
    %v348 = vld [vmem:[#allocation5 + $0x30] sm:$0xf]
    %v349 = vld [vmem:[#allocation5 + $0x34] sm:$0xf]
    %v350 = vld [vmem:[#allocation5 + $0x38] sm:$0xf]
    %v351 = vld [vmem:[#allocation5 + $0x3c] sm:$0xf]
    %v352 = vld [vmem:[%s4] sm:$0x1]
    %v354 = vlaneseq
    %v355 = vshrl.u32 %v354, 7
    %v356 = vsub.s32 0, %v355
    %v357 = vrot.slane %v352, %v356
    %v375 = vunpack.c.l.b16 %v336
    %v376 = vunpack.c.l.b16 %v337
    %v377 = vunpack.c.l.b16 %v338
    %v378 = vunpack.c.l.b16 %v339
    %v379 = vunpack.c.l.b16 %v340
    %v380 = vunpack.c.l.b16 %v341
    %v381 = vunpack.c.l.b16 %v342
    %v382 = vunpack.c.l.b16 %v343
    %v383 = vunpack.c.l.b16 %v344
    %v384 = vunpack.c.l.b16 %v345
    %v385 = vunpack.c.l.b16 %v346
    %v386 = vunpack.c.l.b16 %v347
    %v387 = vunpack.c.l.b16 %v348
    %v388 = vunpack.c.l.b16 %v349
    %v389 = vunpack.c.l.b16 %v350
    %v390 = vunpack.c.l.b16 %v351
    %v391 = vpack.c.b16 %v376, %v375
    %v392 = vpack.c.b16 %v378, %v377
    %v393 = vpack.c.b16 %v380, %v379
    %v394 = vpack.c.b16 %v382, %v381
    %v395 = vpack.c.b16 %v384, %v383
    %v396 = vpack.c.b16 %v386, %v385
    %v397 = vpack.c.b16 %v388, %v387
    %v398 = vpack.c.b16 %v390, %v389
    %407 = vmatprep.subr.bf16.mxu0 0
    %408 = vmatpush1.bf16.msra.mxu0 %v398
    %409 = vmatprep.subr.bf16.mxu0 0
    %410 = vmatpush1.bf16.msra.mxu0 %v397
    %411 = vmatprep.subr.bf16.mxu0 0
    %412 = vmatpush1.bf16.msra.mxu0 %v396
    %413 = vmatprep.subr.bf16.mxu0 0
    %414 = vmatpush1.bf16.msra.mxu0 %v395
    %415 = vmatprep.subr.bf16.mxu0 0
    %416 = vmatpush1.bf16.msra.mxu0 %v394
    %417 = vmatprep.subr.bf16.mxu0 0
    %418 = vmatpush1.bf16.msra.mxu0 %v393
    %419 = vmatprep.subr.bf16.mxu0 0
    %420 = vmatpush1.bf16.msra.mxu0 %v392
    %421 = vmatprep.subr.bf16.mxu0 0
    %422 = vmatpush1.bf16.msra.mxu0 %v391
    %423 = vmatprep.subr.bf16.mxu0 0
    %424 = vmatpush2.bf16.msra.mxu0 0
    %425 = vmatprep.subr.bf16.mxu0 0
    %426 = vmatpush2.bf16.msra.mxu0 0
    %427 = vmatprep.subr.bf16.mxu0 0
    %428 = vmatpush2.bf16.msra.mxu0 0
    %429 = vmatprep.subr.bf16.mxu0 0
    %430 = vmatpush2.bf16.msra.mxu0 0
    %431 = vmatprep.subr.bf16.mxu0 0
    %432 = vmatpush2.bf16.msra.mxu0 0
    %433 = vmatprep.subr.bf16.mxu0 0
    %434 = vmatpush2.bf16.msra.mxu0 0
    %435 = vmatprep.subr.bf16.mxu0 0
    %436 = vmatpush2.bf16.msra.mxu0 0
    %437 = vmatprep.subr.bf16.mxu0 0
    %438 = vmatpush2.bf16.msra.mxu0 0
    %439 = vmatprep.mubr.bf16.mxu0 0
    %440 = vmatmul.mubr.bf16.gmra.mxu0 %v328
    %v441 = vpop.f32.mrf.mxu0
    %v442 = vadd.f32 %v357, %v441
    %v443 = vpop.f32.mrf.mxu0
    %v444 = vpop.f32.mrf.mxu0
    %v445 = vadd.f32 %v357, %v444
    %v446 = vpop.f32.mrf.mxu0
    %447 = vmatprep.mubr.bf16.mxu0 0
    %448 = vmatmul.mubr.bf16.gmra.mxu0 %v329
    %v449 = vpop.f32.mrf.mxu0
    %v450 = vadd.f32 %v357, %v449
    %v451 = vpop.f32.mrf.mxu0
    %v452 = vpop.f32.mrf.mxu0
    %v453 = vadd.f32 %v357, %v452
    %v454 = vpop.f32.mrf.mxu0
    %455 = vmatprep.mubr.bf16.mxu0 0
    %456 = vmatmul.mubr.bf16.gmra.mxu0 %v330
    %v457 = vpop.f32.mrf.mxu0
    %v458 = vadd.f32 %v357, %v457
    %v459 = vpop.f32.mrf.mxu0
    %v460 = vpop.f32.mrf.mxu0
    %v461 = vadd.f32 %v357, %v460
    %v462 = vpop.f32.mrf.mxu0
    %463 = vmatprep.mubr.bf16.mxu0 0
    %464 = vmatmul.mubr.bf16.gmra.mxu0 %v331
    %v465 = vpop.f32.mrf.mxu0
    %v466 = vadd.f32 %v357, %v465
    %v467 = vpop.f32.mrf.mxu0
    %v468 = vpop.f32.mrf.mxu0
    %v469 = vadd.f32 %v357, %v468
    %v470 = vpop.f32.mrf.mxu0
    %471 = vmatprep.mubr.bf16.mxu0 0
    %472 = vmatmul.mubr.bf16.gmra.mxu0 %v332
    %v473 = vpop.f32.mrf.mxu0
    %v474 = vadd.f32 %v357, %v473
    %v475 = vpop.f32.mrf.mxu0
    %v476 = vpop.f32.mrf.mxu0
    %v477 = vadd.f32 %v357, %v476
    %v478 = vpop.f32.mrf.mxu0
    %479 = vmatprep.mubr.bf16.mxu0 0
    %480 = vmatmul.mubr.bf16.gmra.mxu0 %v333
    %v481 = vpop.f32.mrf.mxu0
    %v482 = vadd.f32 %v357, %v481
    %v483 = vpop.f32.mrf.mxu0
    %v484 = vpop.f32.mrf.mxu0
    %v485 = vadd.f32 %v357, %v484
    %v486 = vpop.f32.mrf.mxu0
    %487 = vmatprep.mubr.bf16.mxu0 0
    %488 = vmatmul.mubr.bf16.gmra.mxu0 %v334
    %v489 = vpop.f32.mrf.mxu0
    %v490 = vadd.f32 %v357, %v489
    %v491 = vpop.f32.mrf.mxu0
    %v492 = vpop.f32.mrf.mxu0
    %v493 = vadd.f32 %v357, %v492
    %v494 = vpop.f32.mrf.mxu0
    %495 = vmatprep.mubr.bf16.mxu0 0
    %496 = vmatmul.mubr.bf16.gmra.mxu0 %v335
    %v497 = vpop.f32.mrf.mxu0
    %v498 = vadd.f32 %v357, %v497
    %v499 = vpop.f32.mrf.mxu0
    %v500 = vpop.f32.mrf.mxu0
    %v501 = vadd.f32 %v357, %v500
    %v502 = vpop.f32.mrf.mxu0
    %503 = vdwg.mxu0
    %v504 = vmul.f32 %v442, 0.5
    %v505 = vmul.f32 %v445, 0.5
    %v506 = vmul.f32 %v450, 0.5
    %v507 = vmul.f32 %v453, 0.5
    %v508 = vmul.f32 %v458, 0.5
    %v509 = vmul.f32 %v461, 0.5
    %v510 = vmul.f32 %v466, 0.5
    %v511 = vmul.f32 %v469, 0.5
    %v512 = vmul.f32 %v474, 0.5
    %v513 = vmul.f32 %v477, 0.5
    %v514 = vmul.f32 %v482, 0.5
    %v515 = vmul.f32 %v485, 0.5
    %v516 = vmul.f32 %v490, 0.5
    %v517 = vmul.f32 %v493, 0.5
    %v518 = vmul.f32 %v498, 0.5
    %v519 = vmul.f32 %v501, 0.5
    %v520 = vmul.f32 %v442, 0.70710677
    %v521 = vmul.f32 %v445, 0.70710677
    %v522 = vmul.f32 %v450, 0.70710677
    %v523 = vmul.f32 %v453, 0.70710677
    %v524 = vmul.f32 %v458, 0.70710677
    %v525 = vmul.f32 %v461, 0.70710677
    %v526 = vmul.f32 %v466, 0.70710677
    %v527 = vmul.f32 %v469, 0.70710677
    %v528 = vmul.f32 %v474, 0.70710677
    %v529 = vmul.f32 %v477, 0.70710677
    %v530 = vmul.f32 %v482, 0.70710677
    %v531 = vmul.f32 %v485, 0.70710677
    %v532 = vmul.f32 %v490, 0.70710677
    %v533 = vmul.f32 %v493, 0.70710677
    %v534 = vmul.f32 %v498, 0.70710677
    %v535 = vmul.f32 %v501, 0.70710677
    %v536 = verf.f32.pop %v520
    %v537 = verf.f32.pop %v521
    %v538 = verf.f32.pop %v522
    %v539 = verf.f32.pop %v523
    %v540 = verf.f32.pop %v524
    %v541 = verf.f32.pop %v525
    %v542 = verf.f32.pop %v526
    %v543 = verf.f32.pop %v527
    %v544 = verf.f32.pop %v528
    %v545 = verf.f32.pop %v529
    %v546 = verf.f32.pop %v530
    %v547 = verf.f32.pop %v531
    %v548 = verf.f32.pop %v532
    %v549 = verf.f32.pop %v533
    %v550 = verf.f32.pop %v534
    %v551 = verf.f32.pop %v535
    %v552 = vadd.f32 %v536, 1.0
    %v553 = vadd.f32 %v537, 1.0
    %v554 = vadd.f32 %v538, 1.0
    %v555 = vadd.f32 %v539, 1.0
    %v556 = vadd.f32 %v540, 1.0
    %v557 = vadd.f32 %v541, 1.0
    %v558 = vadd.f32 %v542, 1.0
    %v559 = vadd.f32 %v543, 1.0
    %v560 = vadd.f32 %v544, 1.0
    %v561 = vadd.f32 %v545, 1.0
    %v562 = vadd.f32 %v546, 1.0
    %v563 = vadd.f32 %v547, 1.0
    %v564 = vadd.f32 %v548, 1.0
    %v565 = vadd.f32 %v549, 1.0
    %v566 = vadd.f32 %v550, 1.0
    %v567 = vadd.f32 %v551, 1.0
    %v568 = vmul.f32 %v504, %v552
    %v569 = vmul.f32 %v505, %v553
    %v570 = vmul.f32 %v506, %v554
    %v571 = vmul.f32 %v507, %v555
    %v572 = vmul.f32 %v508, %v556
    %v573 = vmul.f32 %v509, %v557
    %v574 = vmul.f32 %v510, %v558
    %v575 = vmul.f32 %v511, %v559
    %v576 = vmul.f32 %v512, %v560
    %v577 = vmul.f32 %v513, %v561
    %v578 = vmul.f32 %v514, %v562
    %v579 = vmul.f32 %v515, %v563
    %v580 = vmul.f32 %v516, %v564
    %v581 = vmul.f32 %v517, %v565
    %v582 = vmul.f32 %v518, %v566
    %v583 = vmul.f32 %v519, %v567
    %v584 = vpack.c.bf16 %v569, %v568
    %v585 = vpack.c.bf16 %v571, %v570
    %v586 = vpack.c.bf16 %v573, %v572
    %v587 = vpack.c.bf16 %v575, %v574
    %v588 = vpack.c.bf16 %v577, %v576
    %v589 = vpack.c.bf16 %v579, %v578
    %v590 = vpack.c.bf16 %v581, %v580
    %v591 = vpack.c.bf16 %v583, %v582
    %v592 = vld [vmem:[#allocation7] sm:$0xf]
    %v593 = vld [vmem:[#allocation7 + $0x4] sm:$0xf]
    %v594 = vld [vmem:[#allocation7 + $0x8] sm:$0xf]
    %v595 = vld [vmem:[#allocation7 + $0xc] sm:$0xf]
    %v596 = vld [vmem:[#allocation7 + $0x10] sm:$0xf]
    %v597 = vld [vmem:[#allocation7 + $0x14] sm:$0xf]
    %v598 = vld [vmem:[#allocation7 + $0x18] sm:$0xf]
    %v599 = vld [vmem:[#allocation7 + $0x1c] sm:$0xf]
    %v600 = vld [vmem:[#allocation7 + $0x20] sm:$0xf]
    %v601 = vld [vmem:[#allocation7 + $0x24] sm:$0xf]
    %v602 = vld [vmem:[#allocation7 + $0x28] sm:$0xf]
    %v603 = vld [vmem:[#allocation7 + $0x2c] sm:$0xf]
    %v604 = vld [vmem:[#allocation7 + $0x30] sm:$0xf]
    %v605 = vld [vmem:[#allocation7 + $0x34] sm:$0xf]
    %v606 = vld [vmem:[#allocation7 + $0x38] sm:$0xf]
    %v607 = vld [vmem:[#allocation7 + $0x3c] sm:$0xf]
    %v608 = vld [vmem:[%s6] sm:$0x1]
    %v610 = vlaneseq
    %v611 = vshrl.u32 %v610, 7
    %v612 = vsub.s32 0, %v611
    %v613 = vrot.slane %v608, %v612
    %v631 = vunpack.c.l.b16 %v592
    %v632 = vunpack.c.l.b16 %v593
    %v633 = vunpack.c.l.b16 %v594
    %v634 = vunpack.c.l.b16 %v595
    %v635 = vunpack.c.l.b16 %v596
    %v636 = vunpack.c.l.b16 %v597
    %v637 = vunpack.c.l.b16 %v598
    %v638 = vunpack.c.l.b16 %v599
    %v639 = vunpack.c.l.b16 %v600
    %v640 = vunpack.c.l.b16 %v601
    %v641 = vunpack.c.l.b16 %v602
    %v642 = vunpack.c.l.b16 %v603
    %v643 = vunpack.c.l.b16 %v604
    %v644 = vunpack.c.l.b16 %v605
    %v645 = vunpack.c.l.b16 %v606
    %v646 = vunpack.c.l.b16 %v607
    %v647 = vpack.c.b16 %v632, %v631
    %v648 = vpack.c.b16 %v634, %v633
    %v649 = vpack.c.b16 %v636, %v635
    %v650 = vpack.c.b16 %v638, %v637
    %v651 = vpack.c.b16 %v640, %v639
    %v652 = vpack.c.b16 %v642, %v641
    %v653 = vpack.c.b16 %v644, %v643
    %v654 = vpack.c.b16 %v646, %v645
    %663 = vmatprep.subr.bf16.mxu0 0
    %664 = vmatpush1.bf16.msra.mxu0 %v654
    %665 = vmatprep.subr.bf16.mxu0 0
    %666 = vmatpush1.bf16.msra.mxu0 %v653
    %667 = vmatprep.subr.bf16.mxu0 0
    %668 = vmatpush1.bf16.msra.mxu0 %v652
    %669 = vmatprep.subr.bf16.mxu0 0
    %670 = vmatpush1.bf16.msra.mxu0 %v651
    %671 = vmatprep.subr.bf16.mxu0 0
    %672 = vmatpush1.bf16.msra.mxu0 %v650
    %673 = vmatprep.subr.bf16.mxu0 0
    %674 = vmatpush1.bf16.msra.mxu0 %v649
    %675 = vmatprep.subr.bf16.mxu0 0
    %676 = vmatpush1.bf16.msra.mxu0 %v648
    %677 = vmatprep.subr.bf16.mxu0 0
    %678 = vmatpush1.bf16.msra.mxu0 %v647
    %679 = vmatprep.subr.bf16.mxu0 0
    %680 = vmatpush2.bf16.msra.mxu0 0
    %681 = vmatprep.subr.bf16.mxu0 0
    %682 = vmatpush2.bf16.msra.mxu0 0
    %683 = vmatprep.subr.bf16.mxu0 0
    %684 = vmatpush2.bf16.msra.mxu0 0
    %685 = vmatprep.subr.bf16.mxu0 0
    %686 = vmatpush2.bf16.msra.mxu0 0
    %687 = vmatprep.subr.bf16.mxu0 0
    %688 = vmatpush2.bf16.msra.mxu0 0
    %689 = vmatprep.subr.bf16.mxu0 0
    %690 = vmatpush2.bf16.msra.mxu0 0
    %691 = vmatprep.subr.bf16.mxu0 0
    %692 = vmatpush2.bf16.msra.mxu0 0
    %693 = vmatprep.subr.bf16.mxu0 0
    %694 = vmatpush2.bf16.msra.mxu0 0
    %695 = vmatprep.mubr.bf16.mxu0 0
    %696 = vmatmul.mubr.bf16.gmra.mxu0 %v584
    %v697 = vpop.f32.mrf.mxu0
    %v698 = vadd.f32 %v613, %v697
    %v699 = vpop.f32.mrf.mxu0
    %v700 = vpop.f32.mrf.mxu0
    %v701 = vadd.f32 %v613, %v700
    %v702 = vpop.f32.mrf.mxu0
    %703 = vmatprep.mubr.bf16.mxu0 0
    %704 = vmatmul.mubr.bf16.gmra.mxu0 %v585
    %v705 = vpop.f32.mrf.mxu0
    %v706 = vadd.f32 %v613, %v705
    %v707 = vpop.f32.mrf.mxu0
    %v708 = vpop.f32.mrf.mxu0
    %v709 = vadd.f32 %v613, %v708
    %v710 = vpop.f32.mrf.mxu0
    %711 = vmatprep.mubr.bf16.mxu0 0
    %712 = vmatmul.mubr.bf16.gmra.mxu0 %v586
    %v713 = vpop.f32.mrf.mxu0
    %v714 = vadd.f32 %v613, %v713
    %v715 = vpop.f32.mrf.mxu0
    %v716 = vpop.f32.mrf.mxu0
    %v717 = vadd.f32 %v613, %v716
    %v718 = vpop.f32.mrf.mxu0
    %719 = vmatprep.mubr.bf16.mxu0 0
    %720 = vmatmul.mubr.bf16.gmra.mxu0 %v587
    %v721 = vpop.f32.mrf.mxu0
    %v722 = vadd.f32 %v613, %v721
    %v723 = vpop.f32.mrf.mxu0
    %v724 = vpop.f32.mrf.mxu0
    %v725 = vadd.f32 %v613, %v724
    %v726 = vpop.f32.mrf.mxu0
    %727 = vmatprep.mubr.bf16.mxu0 0
    %728 = vmatmul.mubr.bf16.gmra.mxu0 %v588
    %v729 = vpop.f32.mrf.mxu0
    %v730 = vadd.f32 %v613, %v729
    %v731 = vpop.f32.mrf.mxu0
    %v732 = vpop.f32.mrf.mxu0
    %v733 = vadd.f32 %v613, %v732
    %v734 = vpop.f32.mrf.mxu0
    %735 = vmatprep.mubr.bf16.mxu0 0
    %736 = vmatmul.mubr.bf16.gmra.mxu0 %v589
    %v737 = vpop.f32.mrf.mxu0
    %v738 = vadd.f32 %v613, %v737
    %v739 = vpop.f32.mrf.mxu0
    %v740 = vpop.f32.mrf.mxu0
    %v741 = vadd.f32 %v613, %v740
    %v742 = vpop.f32.mrf.mxu0
    %743 = vmatprep.mubr.bf16.mxu0 0
    %744 = vmatmul.mubr.bf16.gmra.mxu0 %v590
    %v745 = vpop.f32.mrf.mxu0
    %v746 = vadd.f32 %v613, %v745
    %v747 = vpop.f32.mrf.mxu0
    %v748 = vpop.f32.mrf.mxu0
    %v749 = vadd.f32 %v613, %v748
    %v750 = vpop.f32.mrf.mxu0
    %751 = vmatprep.mubr.bf16.mxu0 0
    %752 = vmatmul.mubr.bf16.gmra.mxu0 %v591
    %v753 = vpop.f32.mrf.mxu0
    %v754 = vadd.f32 %v613, %v753
    %v755 = vpop.f32.mrf.mxu0
    %v756 = vpop.f32.mrf.mxu0
    %v757 = vadd.f32 %v613, %v756
    %v758 = vpop.f32.mrf.mxu0
    %759 = vdwg.mxu0
    %760 = vst [vmem:[#allocation8] sm:$0xff] %v698
    %761 = vst [vmem:[#allocation8 + $0x8] sm:$0xff] %v701
    %762 = vst [vmem:[#allocation8 + $0x10] sm:$0xff] %v706
    %763 = vst [vmem:[#allocation8 + $0x18] sm:$0xff] %v709
    %764 = vst [vmem:[#allocation8 + $0x20] sm:$0xff] %v714
    %765 = vst [vmem:[#allocation8 + $0x28] sm:$0xff] %v717
    %766 = vst [vmem:[#allocation8 + $0x30] sm:$0xff] %v722
    %767 = vst [vmem:[#allocation8 + $0x38] sm:$0xff] %v725
    %768 = vst [vmem:[#allocation8 + $0x40] sm:$0xff] %v730
    %769 = vst [vmem:[#allocation8 + $0x48] sm:$0xff] %v733
    %770 = vst [vmem:[#allocation8 + $0x50] sm:$0xff] %v738
    %771 = vst [vmem:[#allocation8 + $0x58] sm:$0xff] %v741
    %772 = vst [vmem:[#allocation8 + $0x60] sm:$0xff] %v746
    %773 = vst [vmem:[#allocation8 + $0x68] sm:$0xff] %v749
    %774 = vst [vmem:[#allocation8 + $0x70] sm:$0xff] %v754
    %775 = vst [vmem:[#allocation8 + $0x78] sm:$0xff] %v757
    // Predicated region
    $region42: #{tpu_custom_call.1} parent=1 // pred_check
      _
    $region43: #{tpu_custom_call.1} parent=1 // pred_check_branch
      %777 = sbr.rel (0) target = $region45
    $region44: #{tpu_custom_call.1} parent=1 // pred_region
      %s779 = ssub.s32 2048, 2048
      %780 = vsyncadd [#allocation4], %s779
      %s781 = sshll.u32 [#allocation8], 4
      %s782 = int_to_ptr.vmem [resolvable:$true] %s781
      %787 = dma.vmem_to_hbm [thread:$0]  %s782, 2048, %s7, [#allocation4], 128, 128, 8
    $region45: #{tpu_custom_call.1} parent=1 // pred_fallthru
      _
    // Predicated region
    $region46: #{tpu_custom_call.1} parent=1 // pred_check
      _
    $region47: #{tpu_custom_call.1} parent=1 // pred_check_branch
      %789 = sbr.rel (0) target = $region49
    $region48: #{tpu_custom_call.1} parent=1 // pred_region
      %790 = dma.done [#allocation4], 2048
    $region49: #{tpu_custom_call.1} parent=1 // pred_fallthru
      _
    %791 = vsyncpa [#allocation3], 1
    %792 = vsyncpa [#allocation6], 1
    %793 = vsyncpa [#allocation4], 1

</llo_original>
